<compile_context>
chip_gen: v5e
topology: v5e:2x2
jax: 0.10.0
libtpu: 0.0.40
codegen_flags: <defaults>
</compile_context>

<pallas_src>
from functools import partial

import jax
import jax.numpy as jnp
from jax import lax
from jax.experimental import pallas as pl
from jax.experimental.pallas import tpu as pltpu

DIM = 128            # channel dim (lane-dense: multiple of 128)
HIDDEN = 4 * DIM     # FFN hidden dim
B, T = 2, 8
BLOCK_ID, N_BLOCKS = 0, 2

TILE_M = 128         # rows per block (clamped to the actual row count)
TILE_H = 256         # hidden (reduction) tile — sized for v7x's 64 MiB VMEM


def _cmix_kernel(x_ref, xs_ref, xk_ref, kw_ref, vw_ref, o_ref, kin_ref, acc_ref):
    """One (row-tile, hidden-tile) step of the fused CMix forward."""
    h = pl.program_id(1)

    @pl.when(h == 0)
    def _init():
        x = x_ref[...]                                        # (tile_m, D) f32
        # token-shift mix: k = x + (shift(x) - x) * x_k ; cast to bf16 ONCE and
        # cache in VMEM scratch so every hidden tile reuses the MXU operand.
        kin_ref[...] = (x + (xs_ref[...] - x) * xk_ref[...]).astype(kin_ref.dtype)
        acc_ref[...] = jnp.zeros_like(acc_ref)

    # key matmul -> relu()**2 ; hidden tile never leaves VMEM/vregs
    hid = jnp.dot(kin_ref[...], kw_ref[...],
                  preferred_element_type=jnp.float32)         # (tile_m, tile_h)
    hid = jnp.square(jnp.maximum(hid, 0.0))                   # relu(.)**2 in f32

    # value matmul, accumulated over hidden tiles in f32
    acc_ref[...] += jnp.dot(hid.astype(jnp.bfloat16), vw_ref[...],
                            preferred_element_type=jnp.float32)

    @pl.when(h == pl.num_programs(1) - 1)
    def _finalize():
        o_ref[...] = acc_ref[...].astype(o_ref.dtype)


@partial(jax.jit, static_argnames=("tile_m", "tile_h"))
def cmix_forward(x, x_k, key_w, value_w, *, tile_m=TILE_M, tile_h=TILE_H):
    """x: (B, T, D) f32; x_k: (D,); key_w: (D, H); value_w: (H, D) -> (B, T, D)."""
    Bx, Tx, D = x.shape
    H = key_w.shape[1]
    M = Bx * Tx
    tile_m = min(tile_m, M)
    tile_h = min(tile_h, H)
    assert M % tile_m == 0 and tile_m % 8 == 0
    assert H % tile_h == 0 and D % 128 == 0

    # nn.ZeroPad2d((0,0,1,-1)): x_shift[:, t] = x[:, t-1], x_shift[:, 0] = 0.
    # Tiny XLA pad in the wrapper so row tiles stay independent; the mix itself
    # is fused into the kernel (x and shifted-x are each read exactly once).
    x_shift = jnp.pad(x, ((0, 0), (1, 0), (0, 0)))[:, :Tx, :]

    x2 = x.reshape(M, D).astype(jnp.float32)
    xs2 = x_shift.reshape(M, D).astype(jnp.float32)
    xk = x_k.reshape(1, D).astype(jnp.float32)
    kw = key_w.astype(jnp.bfloat16)       # bf16 MXU operands, f32 accumulation
    vw = value_w.astype(jnp.bfloat16)

    flops = 4 * M * D * H                 # two matmuls
    bytes_accessed = 3 * M * D * 4 + 2 * D * H * 2 + D * 4

    out = pl.pallas_call(
        _cmix_kernel,
        grid=(M // tile_m, H // tile_h),
        in_specs=[
            pl.BlockSpec((tile_m, D), lambda m, h: (m, 0)),      # x
            pl.BlockSpec((tile_m, D), lambda m, h: (m, 0)),      # shifted x
            pl.BlockSpec((1, D), lambda m, h: (0, 0)),           # x_k
            pl.BlockSpec((D, tile_h), lambda m, h: (0, h)),      # key weight
            pl.BlockSpec((tile_h, D), lambda m, h: (h, 0)),      # value weight
        ],
        out_specs=pl.BlockSpec((tile_m, D), lambda m, h: (m, 0)),
        out_shape=jax.ShapeDtypeStruct((M, D), jnp.float32),
        scratch_shapes=[pltpu.VMEM((tile_m, D), jnp.bfloat16),   # mixed input k (bf16)
                        pltpu.VMEM((tile_m, D), jnp.float32)],   # f32 accumulator
        compiler_params=pltpu.CompilerParams(
            dimension_semantics=("parallel", "arbitrary")),
        cost_estimate=pl.CostEstimate(flops=flops, transcendentals=0,
                                      bytes_accessed=bytes_accessed),
    )(x2, xs2, xk, kw, vw)
    return out.reshape(Bx, Tx, D)


# ----------------------------- reference & init -----------------------------

def cmix_reference(x, x_k, key_w, value_w):
    x_shift = jnp.pad(x, ((0, 0), (1, 0), (0, 0)))[:, : x.shape[1], :]
    k = x + (x_shift - x) * x_k
    h = jnp.maximum(
        jnp.einsum("btd,dh->bth", k, key_w, precision=lax.Precision.HIGHEST),
        0.0) ** 2
    return jnp.einsum("bth,hd->btd", h, value_w, precision=lax.Precision.HIGHEST)


def init_params(key):
    k_key, k_val = jax.random.split(key)
    ratio_1_to_0 = 1.0 - BLOCK_ID / N_BLOCKS
    ddd = jnp.arange(DIM, dtype=jnp.float32) / DIM
    x_k = 1.0 - ddd ** (ratio_1_to_0 ** 4)                 # exact module formula
    s = 0.5 / DIM ** 0.5
    key_w = jax.random.uniform(k_key, (DIM, HIDDEN), jnp.float32, -s, s)
    # TODO(synk): torch zero-inits value.weight; use a small deterministic
    # uniform instead so the second matmul path is numerically non-trivial.
    sv = 0.5 / HIDDEN ** 0.5
    value_w = jax.random.uniform(k_val, (HIDDEN, DIM), jnp.float32, -sv, sv)
    return x_k, key_w, value_w


if __name__ == "__main__":
    root = jax.random.PRNGKey(0)
    pkey, xkey = jax.random.split(root)
    x_k, key_w, value_w = init_params(pkey)
    x = jax.random.normal(xkey, (B, T, DIM), jnp.float32)

    out = cmix_forward(x, x_k, key_w, value_w)
    jax.block_until_ready(out)

    assert out.shape == (B, T, DIM), out.shape
    assert bool(jnp.all(jnp.isfinite(out)))
    ref = cmix_reference(x, x_k, key_w, value_w)
    max_err = float(jnp.max(jnp.abs(out - ref)))
    assert max_err < 1e-2, f"max abs err vs f32 reference: {max_err}"
    print("KERNEL_OK")
</pallas_src>

<mosaic_0001>
module attributes {stable_mosaic.version = 11 : i64} {
  func.func @_cmix_kernel(%arg0: i32, %arg1: i32, %arg2: memref<16x128xf32, #tpu.memory_space<vmem>>, %arg3: memref<16x128xf32, #tpu.memory_space<vmem>>, %arg4: memref<1x128xf32, #tpu.memory_space<vmem>>, %arg5: memref<128x256xbf16, #tpu.memory_space<vmem>>, %arg6: memref<256x128xbf16, #tpu.memory_space<vmem>>, %arg7: memref<16x128xf32, #tpu.memory_space<vmem>>, %arg8: memref<16x128xbf16, #tpu.memory_space<vmem>>, %arg9: memref<16x128xf32, #tpu.memory_space<vmem>>) attributes {dimension_semantics = [#tpu.dimension_semantics<parallel>, #tpu.dimension_semantics<arbitrary>], iteration_bounds = array<i64: 1, 2>, scalar_prefetch = 0 : i64, scratch_operands = 2 : i64, tpu.core_type = #tpu.core_type<tc>, window_params = [{transform_indices = @transform_0, window_bounds = array<i64: 16, 128>}, {transform_indices = @transform_1, window_bounds = array<i64: 16, 128>}, {pipeline_mode = #tpu.pipeline_mode<synchronous>, transform_indices = @transform_2, window_bounds = array<i64: 1, 128>}, {transform_indices = @transform_3, window_bounds = array<i64: 128, 256>}, {transform_indices = @transform_4, window_bounds = array<i64: 256, 128>}, {transform_indices = @transform_5, window_bounds = array<i64: 16, 128>}]} {
    %c0_i32 = arith.constant 0 : i32
    %0 = arith.cmpi eq, %arg1, %c0_i32 : i32
    %1 = arith.extui %0 : i1 to i32
    %c0_i32_0 = arith.constant 0 : i32
    %2 = arith.cmpi ne, %1, %c0_i32_0 : i32
    scf.if %2 {
      %c0_13 = arith.constant 0 : index
      %c0_14 = arith.constant 0 : index
      %18 = vector.load %arg2[%c0_13, %c0_14] : memref<16x128xf32, #tpu.memory_space<vmem>>, vector<16x128xf32>
      %c0_15 = arith.constant 0 : index
      %c0_16 = arith.constant 0 : index
      %19 = vector.load %arg3[%c0_15, %c0_16] : memref<16x128xf32, #tpu.memory_space<vmem>>, vector<16x128xf32>
      %20 = arith.subf %19, %18 : vector<16x128xf32>
      %c0_17 = arith.constant 0 : index
      %c0_18 = arith.constant 0 : index
      %21 = vector.load %arg4[%c0_17, %c0_18] : memref<1x128xf32, #tpu.memory_space<vmem>>, vector<1x128xf32>
      %22 = vector.broadcast %21 : vector<1x128xf32> to vector<16x128xf32>
      %23 = arith.mulf %20, %22 : vector<16x128xf32>
      %24 = arith.addf %18, %23 : vector<16x128xf32>
      %25 = arith.truncf %24 : vector<16x128xf32> to vector<16x128xbf16>
      %c0_19 = arith.constant 0 : index
      %c0_20 = arith.constant 0 : index
      %26 = vector.load %arg8[%c0_19, %c0_20] : memref<16x128xbf16, #tpu.memory_space<vmem>>, vector<16x128xbf16>
      tpu.vector_store %arg8[%c0_19, %c0_20], %25 {strides = array<i32>} : memref<16x128xbf16, #tpu.memory_space<vmem>>, vector<16x128xbf16>,
      %cst_21 = arith.constant 0.000000e+00 : f32
      %27 = vector.broadcast %cst_21 : f32 to vector<16x128xf32>
      %c0_22 = arith.constant 0 : index
      %c0_23 = arith.constant 0 : index
      %28 = vector.load %arg9[%c0_22, %c0_23] : memref<16x128xf32, #tpu.memory_space<vmem>>, vector<16x128xf32>
      tpu.vector_store %arg9[%c0_22, %c0_23], %27 {strides = array<i32>} : memref<16x128xf32, #tpu.memory_space<vmem>>, vector<16x128xf32>,
    } else {
    }
    %c0 = arith.constant 0 : index
    %c0_1 = arith.constant 0 : index
    %3 = vector.load %arg8[%c0, %c0_1] : memref<16x128xbf16, #tpu.memory_space<vmem>>, vector<16x128xbf16>
    %c0_2 = arith.constant 0 : index
    %c0_3 = arith.constant 0 : index
    %4 = vector.load %arg5[%c0_2, %c0_3] : memref<128x256xbf16, #tpu.memory_space<vmem>>, vector<128x256xbf16>
    %cst = arith.constant dense<0.000000e+00> : vector<16x256xf32>
    %5 = tpu.matmul %3, %4, %cst {dimension_numbers = #tpu.dot_dimension_numbers<[1], [0], [0], [1], [0, 0, 1, 1], [], []>} : vector<16x128xbf16>, vector<128x256xbf16>, vector<16x256xf32> -> vector<16x256xf32>
    %cst_4 = arith.constant 0.000000e+00 : f32
    %6 = vector.broadcast %cst_4 : f32 to vector<16x256xf32>
    %7 = arith.maximumf %5, %6 : vector<16x256xf32>
    %8 = arith.mulf %7, %7 : vector<16x256xf32>
    %c0_5 = arith.constant 0 : index
    %c0_6 = arith.constant 0 : index
    %9 = vector.load %arg9[%c0_5, %c0_6] : memref<16x128xf32, #tpu.memory_space<vmem>>, vector<16x128xf32>
    %10 = arith.truncf %8 : vector<16x256xf32> to vector<16x256xbf16>
    %c0_7 = arith.constant 0 : index
    %c0_8 = arith.constant 0 : index
    %11 = vector.load %arg6[%c0_7, %c0_8] : memref<256x128xbf16, #tpu.memory_space<vmem>>, vector<256x128xbf16>
    %cst_9 = arith.constant dense<0.000000e+00> : vector<16x128xf32>
    %12 = tpu.matmul %10, %11, %cst_9 {dimension_numbers = #tpu.dot_dimension_numbers<[1], [0], [0], [1], [0, 0, 1, 1], [], []>} : vector<16x256xbf16>, vector<256x128xbf16>, vector<16x128xf32> -> vector<16x128xf32>
    %13 = arith.addf %9, %12 : vector<16x128xf32>
    %c0_10 = arith.constant 0 : index
    %c0_11 = arith.constant 0 : index
    %14 = vector.load %arg9[%c0_10, %c0_11] : memref<16x128xf32, #tpu.memory_space<vmem>>, vector<16x128xf32>
    tpu.vector_store %arg9[%c0_10, %c0_11], %13 {strides = array<i32>} : memref<16x128xf32, #tpu.memory_space<vmem>>, vector<16x128xf32>,
    %c1_i32 = arith.constant 1 : i32
    %15 = arith.cmpi eq, %arg1, %c1_i32 : i32
    %16 = arith.extui %15 : i1 to i32
    %c0_i32_12 = arith.constant 0 : i32
    %17 = arith.cmpi ne, %16, %c0_i32_12 : i32
    scf.if %17 {
      %c0_13 = arith.constant 0 : index
      %c0_14 = arith.constant 0 : index
      %18 = vector.load %arg9[%c0_13, %c0_14] : memref<16x128xf32, #tpu.memory_space<vmem>>, vector<16x128xf32>
      %c0_15 = arith.constant 0 : index
      %c0_16 = arith.constant 0 : index
      %19 = vector.load %arg7[%c0_15, %c0_16] : memref<16x128xf32, #tpu.memory_space<vmem>>, vector<16x128xf32>
      tpu.vector_store %arg7[%c0_15, %c0_16], %18 {strides = array<i32>} : memref<16x128xf32, #tpu.memory_space<vmem>>, vector<16x128xf32>,
    } else {
    }
    return
  }
  func.func @transform_0(%arg0: i32, %arg1: i32) -> (i32, i32) {
    %c0_i32 = arith.constant 0 : i32
    %c0_i32_0 = arith.constant 0 : i32
    return %arg0, %c0_i32 : i32, i32
  }
  func.func @transform_1(%arg0: i32, %arg1: i32) -> (i32, i32) {
    %c0_i32 = arith.constant 0 : i32
    %c0_i32_0 = arith.constant 0 : i32
    return %arg0, %c0_i32 : i32, i32
  }
  func.func @transform_2(%arg0: i32, %arg1: i32) -> (i32, i32) {
    %c0_i32 = arith.constant 0 : i32
    %c0_i32_0 = arith.constant 0 : i32
    %c0_i32_1 = arith.constant 0 : i32
    return %c0_i32, %c0_i32_0 : i32, i32
  }
  func.func @transform_3(%arg0: i32, %arg1: i32) -> (i32, i32) {
    %c0_i32 = arith.constant 0 : i32
    %c0_i32_0 = arith.constant 0 : i32
    return %c0_i32, %arg1 : i32, i32
  }
  func.func @transform_4(%arg0: i32, %arg1: i32) -> (i32, i32) {
    %c0_i32 = arith.constant 0 : i32
    %c0_i32_0 = arith.constant 0 : i32
    return %arg1, %c0_i32 : i32, i32
  }
  func.func @transform_5(%arg0: i32, %arg1: i32) -> (i32, i32) {
    %c0_i32 = arith.constant 0 : i32
    %c0_i32_0 = arith.constant 0 : i32
    return %arg0, %c0_i32 : i32, i32
  }
}

</mosaic_0001>

<llo_original>
// kernel: cmix_forward.1
$region0: #{cmix_forward.1}
  #allocation0 [shape = 'u32[]', space=smem, size = 0x4, offset = 0x4, fixed_abs, tag = 'smem constant byte address 0x4 - core index']
  #allocation1 [shape = 'u32[72,128]{1,0:T(1,128)}', space=vmem, size = 0x9000, scoped, tag = 'internal scratch']
  #allocation2 [shape = 'bf16[16,128]{1,0:T(8,128)(2,1)}', space=vmem, size = 0x1000, scoped, tag = 'scratch operand']
  #allocation3 [shape = 'f32[16,128]{1,0:T(8,128)}', space=vmem, size = 0x2000, scoped, tag = 'scratch operand']
  %s0 = inlined_call_operand.vmem [shape: f32[16,128], index: 0, kind: input, shape index: {}]
  %s1 = inlined_call_operand.vmem [shape: f32[16,128], index: 1, kind: input, shape index: {}]
  %s2 = inlined_call_operand.vmem [shape: f32[1,128], index: 2, kind: input, shape index: {}]
  %s3 = inlined_call_operand.vmem [shape: bf16[128,512], index: 3, kind: input, shape index: {}]
  %s4 = inlined_call_operand.vmem [shape: bf16[512,128], index: 4, kind: input, shape index: {}]
  %s5 = inlined_call_operand.hbm [shape: f32[16,128], index: 5, kind: output, shape index: {}]
  %s6 = sld [smem:[#allocation0]]
  $region99: #{cmix_forward.1} parent=0
    _
  %s8 = ssub.s32 1, %s6
  %s9 = scalar_select 0, %s8, %s6
  $region1: #{cmix_forward.1} parent=0
    #allocation4 [shape = 'u8[131072]{0}', space=vmem, size = 0x20000, scoped, tag = 'input window, operand 3']
    #allocation5 [shape = 'u8[8192]{0}', space=vmem, size = 0x2000, scoped, tag = 'output window, operand 0, single buffered']
    #allocation6 [shape = 's32[2]{0}', space=sflag, size = 0x8, scoped, tag = 'scoped memory for cmix_forward.1']
    %10 = vsyncpa [#allocation6], 0
    loop: start=0, step=1, limit=4
    $region2: #{cmix_forward.1} parent=1 // loop_pre_header
      _
    $region3: #{cmix_forward.1} parent=1 // loop_header
      %s12 = sphi 0, %s16
      %p13 = scmp.ge.s32.totalorder %s12, 4
      %s19 = sphi 0, %s31
      %s20 = sphi 0, %s27
      %s21 = sphi 0, %s19
      %s22 = sphi 0, %s20
      %s23 = sphi 0, %s21
      %s24 = sphi 0, %s22
      %s34 = sphi 0, %s36
      %s37 = sphi 0, %s34
      %s38 = sphi 0, %s37
      %s54 = sphi 0, %s38
      %s60 = sphi 0, %s62
      %s63 = sphi 0, %s60
      %s64 = sphi 0, %s63
      %s80 = sphi 0, %s64
      %s84 = sphi 0, %s84
      %s86 = sphi 0, %s84
      %s87 = sphi 0, %s86
      %s101 = sphi 0, %s87
      %s107 = sphi 0, %s109
      %s110 = sphi 0, %s107
      %s111 = sphi 0, %s110
      %s127 = sphi 0, %s111
      %s133 = sphi 0, %s135
      %s136 = sphi 0, %s133
      %s137 = sphi 0, %s136
      %s153 = sphi 0, %s137
      %s159 = sphi 0, %s161
      %s162 = sphi 0, %s159
      %s163 = sphi 0, %s162
      %s179 = sphi 0, %s163
    $region4: #{cmix_forward.1} parent=1 // loop_header_branch
      %15 = sbr.rel (%p13) target = $region8
    $region5: #{cmix_forward.1} parent=1 // loop_body
      %s17 = ssub.s32 %s12, 1
      %s18 = ssub.s32 %s12, 2
      %s25 = sadd.s32 1, %s20
      %p26 = scmp.ge.s32.totalorder %s25, 2
      %s27 = scalar_select %p26, 0, %s25
      %s28 = sadd.s32 1, %s19
      %s29 = scalar_select %p26, %s28, %s19
      %p30 = scmp.ge.s32.totalorder %s29, 1
      %s31 = scalar_select %p30, 0, %s29
      %s32 = ssub.s32 %s19, %s31
      %p33 = scmp.eq.s32.totalorder %s32, 0
      %s35 = sadd.s32 %s34, 1
      %s36 = scalar_select %p33, %s34, %s35
      %p39 = pneg %p33
      %p40 = scmp.eq.s32.totalorder %s12, 1
      %p41 = por %p39, %p40
      %p42 = scmp.ne.s32.totalorder %s34, %s37
      %p43 = scmp.eq.s32.totalorder %s12, 0
      %p44 = por %p42, %p43
      %p45 = scmp.ne.s32.totalorder %s34, %s37
      %p46 = scmp.eq.s32.totalorder %s17, 1
      %p47 = por %p45, %p46
      %p48 = scmp.ne.s32.totalorder %s37, %s38
      %p49 = scmp.eq.s32.totalorder %s17, 0
      %p50 = por %p48, %p49
      %p51 = scmp.ne.s32.totalorder %s37, %s38
      %p52 = scmp.eq.s32.totalorder %s18, 1
      %p53 = por %p51, %p52
      %p55 = scmp.ne.s32.totalorder %s38, %s54
      %p56 = scmp.eq.s32.totalorder %s18, 0
      %p57 = por %p55, %p56
      %s58 = ssub.s32 %s19, %s31
      %p59 = scmp.eq.s32.totalorder %s58, 0
      %s61 = sadd.s32 %s60, 1
      %s62 = scalar_select %p59, %s60, %s61
      %p65 = pneg %p59
      %p66 = scmp.eq.s32.totalorder %s12, 1
      %p67 = por %p65, %p66
      %p68 = scmp.ne.s32.totalorder %s60, %s63
      %p69 = scmp.eq.s32.totalorder %s12, 0
      %p70 = por %p68, %p69
      %p71 = scmp.ne.s32.totalorder %s60, %s63
      %p72 = scmp.eq.s32.totalorder %s17, 1
      %p73 = por %p71, %p72
      %p74 = scmp.ne.s32.totalorder %s63, %s64
      %p75 = scmp.eq.s32.totalorder %s17, 0
      %p76 = por %p74, %p75
      %p77 = scmp.ne.s32.totalorder %s63, %s64
      %p78 = scmp.eq.s32.totalorder %s18, 1
      %p79 = por %p77, %p78
      %p81 = scmp.ne.s32.totalorder %s64, %s80
      %p82 = scmp.eq.s32.totalorder %s18, 0
      %p83 = por %p81, %p82
      %s85 = sadd.s32 %s84, 1
      %p88 = scmp.eq.s32.totalorder %s12, 1
      %p89 = scmp.ne.s32.totalorder %s84, %s86
      %p90 = scmp.eq.s32.totalorder %s12, 0
      %p91 = por %p89, %p90
      %p92 = scmp.ne.s32.totalorder %s84, %s86
      %p93 = scmp.eq.s32.totalorder %s17, 1
      %p94 = por %p92, %p93
      %p95 = scmp.ne.s32.totalorder %s86, %s87
      %p96 = scmp.eq.s32.totalorder %s17, 0
      %p97 = por %p95, %p96
      %p98 = scmp.ne.s32.totalorder %s86, %s87
      %p99 = scmp.eq.s32.totalorder %s18, 1
      %p100 = por %p98, %p99
      %p102 = scmp.ne.s32.totalorder %s87, %s101
      %p103 = scmp.eq.s32.totalorder %s18, 0
      %p104 = por %p102, %p103
      %s105 = ssub.s32 %s20, %s27
      %p106 = scmp.eq.s32.totalorder %s105, 0
      %s108 = sadd.s32 %s107, 1
      %s109 = scalar_select %p106, %s107, %s108
      %p112 = pneg %p106
      %p113 = scmp.eq.s32.totalorder %s12, 1
      %p114 = por %p112, %p113
      %p115 = scmp.ne.s32.totalorder %s107, %s110
      %p116 = scmp.eq.s32.totalorder %s12, 0
      %p117 = por %p115, %p116
      %p118 = scmp.ne.s32.totalorder %s107, %s110
      %p119 = scmp.eq.s32.totalorder %s17, 1
      %p120 = por %p118, %p119
      %p121 = scmp.ne.s32.totalorder %s110, %s111
      %p122 = scmp.eq.s32.totalorder %s17, 0
      %p123 = por %p121, %p122
      %p124 = scmp.ne.s32.totalorder %s110, %s111
      %p125 = scmp.eq.s32.totalorder %s18, 1
      %p126 = por %p124, %p125
      %p128 = scmp.ne.s32.totalorder %s111, %s127
      %p129 = scmp.eq.s32.totalorder %s18, 0
      %p130 = por %p128, %p129
      %s131 = ssub.s32 %s20, %s27
      %p132 = scmp.eq.s32.totalorder %s131, 0
      %s134 = sadd.s32 %s133, 1
      %s135 = scalar_select %p132, %s133, %s134
      %p138 = pneg %p132
      %p139 = scmp.eq.s32.totalorder %s12, 1
      %p140 = por %p138, %p139
      %p141 = scmp.ne.s32.totalorder %s133, %s136
      %p142 = scmp.eq.s32.totalorder %s12, 0
      %p143 = por %p141, %p142
      %p144 = scmp.ne.s32.totalorder %s133, %s136
      %p145 = scmp.eq.s32.totalorder %s17, 1
      %p146 = por %p144, %p145
      %p147 = scmp.ne.s32.totalorder %s136, %s137
      %p148 = scmp.eq.s32.totalorder %s17, 0
      %p149 = por %p147, %p148
      %p150 = scmp.ne.s32.totalorder %s136, %s137
      %p151 = scmp.eq.s32.totalorder %s18, 1
      %p152 = por %p150, %p151
      %p154 = scmp.ne.s32.totalorder %s137, %s153
      %p155 = scmp.eq.s32.totalorder %s18, 0
      %p156 = por %p154, %p155
      %s157 = ssub.s32 %s19, %s31
      %p158 = scmp.eq.s32.totalorder %s157, 0
      %s160 = sadd.s32 %s159, 1
      %s161 = scalar_select %p158, %s159, %s160
      %p164 = pneg %p158
      %p165 = scmp.eq.s32.totalorder %s12, 1
      %p166 = por %p164, %p165
      %p167 = scmp.ne.s32.totalorder %s159, %s162
      %p168 = scmp.eq.s32.totalorder %s12, 0
      %p169 = por %p167, %p168
      %p170 = scmp.ne.s32.totalorder %s159, %s162
      %p171 = scmp.eq.s32.totalorder %s17, 1
      %p172 = por %p170, %p171
      %p173 = scmp.ne.s32.totalorder %s162, %s163
      %p174 = scmp.eq.s32.totalorder %s17, 0
      %p175 = por %p173, %p174
      %p176 = scmp.ne.s32.totalorder %s162, %s163
      %p177 = scmp.eq.s32.totalorder %s18, 1
      %p178 = por %p176, %p177
      %p180 = scmp.ne.s32.totalorder %s163, %s179
      %p181 = scmp.eq.s32.totalorder %s18, 0
      %p182 = por %p180, %p181
      %p183 = scmp.le.s32.totalorder 1, %s12
      %p184 = scmp.lt.s32.totalorder %s12, 3
      %p185 = pnand %p183, %p184
      %p186 = pneg %p185
      // Predicated region
      $region9: #{cmix_forward.1} parent=5 // pred_check
        _
      $region10: #{cmix_forward.1} parent=5 // pred_check_branch
        %188 = sbr.rel (%p185) target = $region12
      $region11: #{cmix_forward.1} parent=5 // pred_region
        %s189 = ssub.s32 %s12, 1
        // Predicated region
        $region13: #{cmix_forward.1} parent=11 // pred_check
          %p190 = pneg %p50
        $region14: #{cmix_forward.1} parent=11 // pred_check_branch
          %192 = sbr.rel (%p190) target = $region16
        $region15: #{cmix_forward.1} parent=11 // pred_region
          %s193 = smul.u32 2, %s21
          %p194 = scmp.lt.s32.totalorder %s193, 1
          %s195 = scalar_select %p194, %s193, 1
          %s196 = smul.addr %s195, 8
          %s197 = scalar_lea.vmem %s0, %s196
          %s198 = smul.u32 2, %s21
        $region16: #{cmix_forward.1} parent=11 // pred_fallthru
          _
        // Predicated region
        $region17: #{cmix_forward.1} parent=11 // pred_check
          %p199 = pneg %p76
        $region18: #{cmix_forward.1} parent=11 // pred_check_branch
          %201 = sbr.rel (%p199) target = $region20
        $region19: #{cmix_forward.1} parent=11 // pred_region
          %s202 = smul.u32 2, %s21
          %p203 = scmp.lt.s32.totalorder %s202, 1
          %s204 = scalar_select %p203, %s202, 1
          %s205 = smul.addr %s204, 8
          %s206 = scalar_lea.vmem %s1, %s205
          %s207 = smul.u32 2, %s21
        $region20: #{cmix_forward.1} parent=11 // pred_fallthru
          _
        // Predicated region
        $region21: #{cmix_forward.1} parent=11 // pred_check
          %p208 = pneg %p97
        $region22: #{cmix_forward.1} parent=11 // pred_check_branch
          %210 = sbr.rel (%p208) target = $region24
        $region23: #{cmix_forward.1} parent=11 // pred_region
          _
        $region24: #{cmix_forward.1} parent=11 // pred_fallthru
          _
      $region12: #{cmix_forward.1} parent=5 // pred_fallthru
        _
      %p211 = scmp.lt.s32.totalorder %s12, 2
      // Predicated region
      $region25: #{cmix_forward.1} parent=5 // pred_check
        %p212 = pneg %p211
      $region26: #{cmix_forward.1} parent=5 // pred_check_branch
        %214 = sbr.rel (%p212) target = $region28
      $region27: #{cmix_forward.1} parent=5 // pred_region
        // Predicated region
        $region29: #{cmix_forward.1} parent=27 // pred_check
          %p215 = pneg %p117
        $region30: #{cmix_forward.1} parent=27 // pred_check_branch
          %217 = sbr.rel (%p215) target = $region32
        $region31: #{cmix_forward.1} parent=27 // pred_region
          %s218 = sand.u32 %s107, 1
          %s219 = sand.u32 %s107, 1
          %s220 = smul.addr %s219, 128
          %s221 = scalar_lea.vmem [#allocation4], %s220
          %s222 = smul.u32 2, %s20
          %s223 = smul.addr %s222, 4
          %s224 = scalar_lea.vmem %s3, %s223
          // Predicated region
          $region33: #{cmix_forward.1} parent=31 // pred_check
            _
          $region34: #{cmix_forward.1} parent=31 // pred_check_branch
            %226 = sbr.rel (0) target = $region36
          $region35: #{cmix_forward.1} parent=31 // pred_region
            // Predicated region
            $region37: #{cmix_forward.1} parent=35 // pred_check
              _
            $region38: #{cmix_forward.1} parent=35 // pred_check_branch
              %228 = sbr.rel (0) target = $region40
            $region39: #{cmix_forward.1} parent=35 // pred_region
              // Predicated region
              $region52: #{cmix_forward.1} parent=39 // pred_check
                _
              $region53: #{cmix_forward.1} parent=39 // pred_check_branch
                %274 = sbr.rel (0) target = $region55
              $region54: #{cmix_forward.1} parent=39 // pred_region
                loop: start=0, step=1, limit=1
                $region56: #{cmix_forward.1} parent=54 // loop_pre_header
                  _
                $region57: #{cmix_forward.1} parent=54 // loop_header
                  %s276 = sphi 0, %s280
                  %p277 = scmp.ge.s32.totalorder %s276, 1
                  %s281 = sphi %s224, %s224
                  %s282 = sphi %s221, %s221
                $region58: #{cmix_forward.1} parent=54 // loop_header_branch
                  %279 = sbr.rel (%p277) target = $region62
                $region59: #{cmix_forward.1} parent=54 // loop_body
                  %v283 = vld [vmem:[%s281] sm:$0xff]
                  %284 = vst [vmem:[%s282] sm:$0xff] %v283
                  %v285 = vld [vmem:[%s281 + $0x10] sm:$0xff]
                  %286 = vst [vmem:[%s282 + $0x8] sm:$0xff] %v285
                  %v287 = vld [vmem:[%s281 + $0x20] sm:$0xff]
                  %288 = vst [vmem:[%s282 + $0x10] sm:$0xff] %v287
                  %v289 = vld [vmem:[%s281 + $0x30] sm:$0xff]
                  %290 = vst [vmem:[%s282 + $0x18] sm:$0xff] %v289
                  %v291 = vld [vmem:[%s281 + $0x40] sm:$0xff]
                  %292 = vst [vmem:[%s282 + $0x20] sm:$0xff] %v291
                  %v293 = vld [vmem:[%s281 + $0x50] sm:$0xff]
                  %294 = vst [vmem:[%s282 + $0x28] sm:$0xff] %v293
                  %v295 = vld [vmem:[%s281 + $0x60] sm:$0xff]
                  %296 = vst [vmem:[%s282 + $0x30] sm:$0xff] %v295
                  %v297 = vld [vmem:[%s281 + $0x70] sm:$0xff]
                  %298 = vst [vmem:[%s282 + $0x38] sm:$0xff] %v297
                  %v299 = vld [vmem:[%s281 + $0x80] sm:$0xff]
                  %300 = vst [vmem:[%s282 + $0x40] sm:$0xff] %v299
                  %v301 = vld [vmem:[%s281 + $0x90] sm:$0xff]
                  %302 = vst [vmem:[%s282 + $0x48] sm:$0xff] %v301
                  %v303 = vld [vmem:[%s281 + $0xa0] sm:$0xff]
                  %304 = vst [vmem:[%s282 + $0x50] sm:$0xff] %v303
                  %v305 = vld [vmem:[%s281 + $0xb0] sm:$0xff]
                  %306 = vst [vmem:[%s282 + $0x58] sm:$0xff] %v305
                  %v307 = vld [vmem:[%s281 + $0xc0] sm:$0xff]
                  %308 = vst [vmem:[%s282 + $0x60] sm:$0xff] %v307
                  %v309 = vld [vmem:[%s281 + $0xd0] sm:$0xff]
                  %310 = vst [vmem:[%s282 + $0x68] sm:$0xff] %v309
                  %v311 = vld [vmem:[%s281 + $0xe0] sm:$0xff]
                  %312 = vst [vmem:[%s282 + $0x70] sm:$0xff] %v311
                  %v313 = vld [vmem:[%s281 + $0xf0] sm:$0xff]
                  %314 = vst [vmem:[%s282 + $0x78] sm:$0xff] %v313
                $region60: #{cmix_forward.1} parent=54 // loop_footer
                  %s280 = sadd.s32 1, %s276
                $region61: #{cmix_forward.1} parent=54 // loop_footer_branch
                  %275 = sbr.rel target = $region57
                $region62: #{cmix_forward.1} parent=54 // loop_exit
                  _
              $region55: #{cmix_forward.1} parent=39 // pred_fallthru
                _
              // Predicated region
              $region63: #{cmix_forward.1} parent=39 // pred_check
                _
              $region64: #{cmix_forward.1} parent=39 // pred_check_branch
                %316 = sbr.rel target = $region66
              $region65: #{cmix_forward.1} parent=39 // pred_region
                _
              $region66: #{cmix_forward.1} parent=39 // pred_fallthru
                _
            $region40: #{cmix_forward.1} parent=35 // pred_fallthru
              _
            // Predicated region
            $region41: #{cmix_forward.1} parent=35 // pred_check
              _
            $region42: #{cmix_forward.1} parent=35 // pred_check_branch
              %230 = sbr.rel target = $region44
            $region43: #{cmix_forward.1} parent=35 // pred_region
              %s232 = ssub.s32 256, 1
              loop: start=0, step=1, limit=1
              $region45: #{cmix_forward.1} parent=43 // loop_pre_header
                _
              $region46: #{cmix_forward.1} parent=43 // loop_header
                %s234 = sphi 0, %s238
                %p235 = scmp.ge.s32.totalorder %s234, 1
                %s239 = sphi %s224, %s224
                %s240 = sphi %s221, %s221
              $region47: #{cmix_forward.1} parent=43 // loop_header_branch
                %237 = sbr.rel (%p235) target = $region51
              $region48: #{cmix_forward.1} parent=43 // loop_body
                %v241 = vld [vmem:[%s239] sm:%s232]
                %242 = vst [vmem:[%s240] sm:%s232] %v241
                %v243 = vld [vmem:[%s239 + $0x10] sm:%s232]
                %244 = vst [vmem:[%s240 + $0x8] sm:%s232] %v243
                %v245 = vld [vmem:[%s239 + $0x20] sm:%s232]
                %246 = vst [vmem:[%s240 + $0x10] sm:%s232] %v245
                %v247 = vld [vmem:[%s239 + $0x30] sm:%s232]
                %248 = vst [vmem:[%s240 + $0x18] sm:%s232] %v247
                %v249 = vld [vmem:[%s239 + $0x40] sm:%s232]
                %250 = vst [vmem:[%s240 + $0x20] sm:%s232] %v249
                %v251 = vld [vmem:[%s239 + $0x50] sm:%s232]
                %252 = vst [vmem:[%s240 + $0x28] sm:%s232] %v251
                %v253 = vld [vmem:[%s239 + $0x60] sm:%s232]
                %254 = vst [vmem:[%s240 + $0x30] sm:%s232] %v253
                %v255 = vld [vmem:[%s239 + $0x70] sm:%s232]
                %256 = vst [vmem:[%s240 + $0x38] sm:%s232] %v255
                %v257 = vld [vmem:[%s239 + $0x80] sm:%s232]
                %258 = vst [vmem:[%s240 + $0x40] sm:%s232] %v257
                %v259 = vld [vmem:[%s239 + $0x90] sm:%s232]
                %260 = vst [vmem:[%s240 + $0x48] sm:%s232] %v259
                %v261 = vld [vmem:[%s239 + $0xa0] sm:%s232]
                %262 = vst [vmem:[%s240 + $0x50] sm:%s232] %v261
                %v263 = vld [vmem:[%s239 + $0xb0] sm:%s232]
                %264 = vst [vmem:[%s240 + $0x58] sm:%s232] %v263
                %v265 = vld [vmem:[%s239 + $0xc0] sm:%s232]
                %266 = vst [vmem:[%s240 + $0x60] sm:%s232] %v265
                %v267 = vld [vmem:[%s239 + $0xd0] sm:%s232]
                %268 = vst [vmem:[%s240 + $0x68] sm:%s232] %v267
                %v269 = vld [vmem:[%s239 + $0xe0] sm:%s232]
                %270 = vst [vmem:[%s240 + $0x70] sm:%s232] %v269
                %v271 = vld [vmem:[%s239 + $0xf0] sm:%s232]
                %272 = vst [vmem:[%s240 + $0x78] sm:%s232] %v271
              $region49: #{cmix_forward.1} parent=43 // loop_footer
                %s238 = sadd.s32 1, %s234
              $region50: #{cmix_forward.1} parent=43 // loop_footer_branch
                %233 = sbr.rel target = $region46
              $region51: #{cmix_forward.1} parent=43 // loop_exit
                _
            $region44: #{cmix_forward.1} parent=35 // pred_fallthru
              _
          $region36: #{cmix_forward.1} parent=31 // pred_fallthru
            _
          %317 = vnop
        $region32: #{cmix_forward.1} parent=27 // pred_fallthru
          _
        // Predicated region
        $region67: #{cmix_forward.1} parent=27 // pred_check
          %p318 = pneg %p143
        $region68: #{cmix_forward.1} parent=27 // pred_check_branch
          %320 = sbr.rel (%p318) target = $region70
        $region69: #{cmix_forward.1} parent=27 // pred_region
          %s321 = smul.u32 32, %s20
          %p322 = scmp.lt.s32.totalorder %s321, 63
          %s323 = scalar_select %p322, %s321, 63
          %s324 = smul.addr %s323, 4
          %s325 = scalar_lea.vmem %s4, %s324
          %s326 = smul.u32 32, %s20
        $region70: #{cmix_forward.1} parent=27 // pred_fallthru
          _
      $region28: #{cmix_forward.1} parent=5 // pred_fallthru
        _
      %p327 = scmp.le.s32.totalorder 1, %s12
      %p328 = scmp.lt.s32.totalorder %s12, 3
      %p329 = pnand %p327, %p328
      %p330 = pneg %p329
      // Predicated region
      $region71: #{cmix_forward.1} parent=5 // pred_check
        _
      $region72: #{cmix_forward.1} parent=5 // pred_check_branch
        %332 = sbr.rel (%p329) target = $region74
      $region73: #{cmix_forward.1} parent=5 // pred_region
        %s333 = ssub.s32 %s12, 1
        %s334 = sand.u32 %s110, 1
        %s335 = sand.u32 %s110, 1
        %s336 = smul.addr %s335, 128
        %s337 = scalar_lea.vmem [#allocation4], %s336
        // Predicated region
        $region75: #{cmix_forward.1} parent=73 // pred_check
          %p338 = pneg %p123
        $region76: #{cmix_forward.1} parent=73 // pred_check_branch
          %340 = sbr.rel (%p338) target = $region78
        $region77: #{cmix_forward.1} parent=73 // pred_region
          _
        $region78: #{cmix_forward.1} parent=73 // pred_fallthru
          _
        %s341 = smul.u32 2, %s21
        %p342 = scmp.lt.s32.totalorder %s341, 1
        %s343 = scalar_select %p342, %s341, 1
        %s344 = smul.addr %s343, 8
        %s345 = scalar_lea.vmem %s0, %s344
        %p346 = pneg %p50
        %p347 = pneg %p47
        %s348 = smul.u32 2, %s21
        %p349 = scmp.lt.s32.totalorder %s348, 1
        %s350 = scalar_select %p349, %s348, 1
        %s351 = smul.addr %s350, 8
        %s352 = scalar_lea.vmem %s1, %s351
        %p353 = pneg %p76
        %p354 = pneg %p73
        %p355 = pneg %p97
        %p356 = pneg %p94
        %s357 = sand.u32 %s110, 1
        %s358 = sand.u32 %s110, 1
        %s359 = smul.addr %s358, 128
        %s360 = scalar_lea.vmem [#allocation4], %s359
        %p361 = pneg %p123
        %p362 = pneg %p120
        %s363 = smul.u32 32, %s22
        %p364 = scmp.lt.s32.totalorder %s363, 63
        %s365 = scalar_select %p364, %s363, 63
        %s366 = smul.addr %s365, 4
        %s367 = scalar_lea.vmem %s4, %s366
        %p368 = pneg %p149
        %p369 = pneg %p146
        %p370 = pneg %p175
        %p371 = pneg %p172
        %s372 = smul.u32 2, %s21
        %p373 = scmp.lt.s32.totalorder %s372, 1
        %s374 = scalar_select %p373, %s372, 1
        %s375 = smul.addr %s374, 8
        %s376 = scalar_lea.vmem %s0, %s375
        %s377 = smul.u32 2, %s21
        %s378 = smul.u32 2, %s21
        %p379 = scmp.lt.s32.totalorder %s378, 1
        %s380 = scalar_select %p379, %s378, 1
        %s381 = smul.addr %s380, 8
        %s382 = scalar_lea.vmem %s1, %s381
        %s383 = smul.u32 2, %s21
        %s384 = smul.u32 2, %s22
        %s385 = smul.u32 32, %s22
        %p386 = scmp.lt.s32.totalorder %s385, 63
        %s387 = scalar_select %p386, %s385, 63
        %s388 = smul.addr %s387, 4
        %s389 = scalar_lea.vmem %s4, %s388
        %s390 = smul.u32 32, %s22
        %s391 = smul.u32 2, %s21
        %p392 = scmp.eq.s32.totalorder %s22, 0
        // Predicated region
        $region79: #{cmix_forward.1} parent=73 // pred_check
          %p393 = pneg %p392
        $region80: #{cmix_forward.1} parent=73 // pred_check_branch
          %395 = sbr.rel (%p393) target = $region82
        $region81: #{cmix_forward.1} parent=73 // pred_region
          %v396 = vld [vmem:[%s376] sm:$0xff]
          %v397 = vld [vmem:[%s376 + $0x8] sm:$0xff]
          %v398 = vld [vmem:[%s382] sm:$0xff]
          %v399 = vld [vmem:[%s382 + $0x8] sm:$0xff]
          %v400 = vsub.f32 %v398, %v396
          %v401 = vsub.f32 %v399, %v397
          %v402 = vld [vmem:[%s2] sm:$0x1]
          %v404 = vperm.slane %v402, 0
          %v406 = vmul.f32 %v400, %v404
          %v407 = vmul.f32 %v401, %v404
          %v408 = vadd.f32 %v396, %v406
          %v409 = vadd.f32 %v397, %v407
          %v410 = vpack.c.bf16 %v408, %v408
          %v411 = vpack.c.bf16 %v409, %v409
          %412 = vst [vmem:[#allocation2] sm:$0xf] %v410
          %413 = vst [vmem:[#allocation2 + $0x4] sm:$0xf] %v411
          %414 = vst [vmem:[#allocation3] sm:$0xff] 0.0
          %415 = vst [vmem:[#allocation3 + $0x8] sm:$0xff] 0.0
        $region82: #{cmix_forward.1} parent=73 // pred_fallthru
          _
        %v416 = vld [vmem:[#allocation2] sm:$0xf]
        %v417 = vld [vmem:[#allocation2 + $0x4] sm:$0xf]
        %v418 = vld [vmem:[%s337] sm:$0xff]
        %v419 = vld [vmem:[%s337 + $0x8] sm:$0xff]
        %v420 = vld [vmem:[%s337 + $0x10] sm:$0xff]
        %v421 = vld [vmem:[%s337 + $0x18] sm:$0xff]
        %v422 = vld [vmem:[%s337 + $0x20] sm:$0xff]
        %v423 = vld [vmem:[%s337 + $0x28] sm:$0xff]
        %v424 = vld [vmem:[%s337 + $0x30] sm:$0xff]
        %v425 = vld [vmem:[%s337 + $0x38] sm:$0xff]
        %v426 = vld [vmem:[%s337 + $0x40] sm:$0xff]
        %v427 = vld [vmem:[%s337 + $0x48] sm:$0xff]
        %v428 = vld [vmem:[%s337 + $0x50] sm:$0xff]
        %v429 = vld [vmem:[%s337 + $0x58] sm:$0xff]
        %v430 = vld [vmem:[%s337 + $0x60] sm:$0xff]
        %v431 = vld [vmem:[%s337 + $0x68] sm:$0xff]
        %v432 = vld [vmem:[%s337 + $0x70] sm:$0xff]
        %v433 = vld [vmem:[%s337 + $0x78] sm:$0xff]
        %v436 = vunpack.c.l.b16 %v416
        %v437 = vunpack.c.l.b16 %v417
        %v438 = vpack.c.b16 %v437, %v436
        %v456 = vunpack.c.l.b16 %v418
        %v457 = vunpack.c.h.b16 %v418
        %v458 = vunpack.c.l.b16 %v419
        %v459 = vunpack.c.h.b16 %v419
        %v460 = vunpack.c.l.b16 %v420
        %v461 = vunpack.c.h.b16 %v420
        %v462 = vunpack.c.l.b16 %v421
        %v463 = vunpack.c.h.b16 %v421
        %v464 = vunpack.c.l.b16 %v422
        %v465 = vunpack.c.h.b16 %v422
        %v466 = vunpack.c.l.b16 %v423
        %v467 = vunpack.c.h.b16 %v423
        %v468 = vunpack.c.l.b16 %v424
        %v469 = vunpack.c.h.b16 %v424
        %v470 = vunpack.c.l.b16 %v425
        %v471 = vunpack.c.h.b16 %v425
        %v472 = vunpack.c.l.b16 %v426
        %v473 = vunpack.c.h.b16 %v426
        %v474 = vunpack.c.l.b16 %v427
        %v475 = vunpack.c.h.b16 %v427
        %v476 = vunpack.c.l.b16 %v428
        %v477 = vunpack.c.h.b16 %v428
        %v478 = vunpack.c.l.b16 %v429
        %v479 = vunpack.c.h.b16 %v429
        %v480 = vunpack.c.l.b16 %v430
        %v481 = vunpack.c.h.b16 %v430
        %v482 = vunpack.c.l.b16 %v431
        %v483 = vunpack.c.h.b16 %v431
        %v484 = vunpack.c.l.b16 %v432
        %v485 = vunpack.c.h.b16 %v432
        %v486 = vunpack.c.l.b16 %v433
        %v487 = vunpack.c.h.b16 %v433
        %v488 = vpack.c.b16 %v458, %v456
        %v489 = vpack.c.b16 %v459, %v457
        %v490 = vpack.c.b16 %v462, %v460
        %v491 = vpack.c.b16 %v463, %v461
        %v492 = vpack.c.b16 %v466, %v464
        %v493 = vpack.c.b16 %v467, %v465
        %v494 = vpack.c.b16 %v470, %v468
        %v495 = vpack.c.b16 %v471, %v469
        %v496 = vpack.c.b16 %v474, %v472
        %v497 = vpack.c.b16 %v475, %v473
        %v498 = vpack.c.b16 %v478, %v476
        %v499 = vpack.c.b16 %v479, %v477
        %v500 = vpack.c.b16 %v482, %v480
        %v501 = vpack.c.b16 %v483, %v481
        %v502 = vpack.c.b16 %v486, %v484
        %v503 = vpack.c.b16 %v487, %v485
        %520 = vmatpush.bf16.msra.mxu0 %v502
        %521 = vmatpush.bf16.msra.mxu0 %v500
        %522 = vmatpush.bf16.msra.mxu0 %v498
        %523 = vmatpush.bf16.msra.mxu0 %v496
        %524 = vmatpush.bf16.msra.mxu0 %v494
        %525 = vmatpush.bf16.msra.mxu0 %v492
        %526 = vmatpush.bf16.msra.mxu0 %v490
        %527 = vmatpush.bf16.msra.mxu0 %v488
        %528 = vmatmul.bf16.gmra.mxu0 %v438
        %v529 = vpop.f32.mrf.mxu0
        %v530 = vadd.f32 0.0, %v529
        %v531 = vpop.f32.mrf.mxu0
        %v532 = vadd.f32 0.0, %v531
        %533 = vdwg.mxu0
        %534 = vmatpush.bf16.msra.mxu0 %v503
        %535 = vmatpush.bf16.msra.mxu0 %v501
        %536 = vmatpush.bf16.msra.mxu0 %v499
        %537 = vmatpush.bf16.msra.mxu0 %v497
        %538 = vmatpush.bf16.msra.mxu0 %v495
        %539 = vmatpush.bf16.msra.mxu0 %v493
        %540 = vmatpush.bf16.msra.mxu0 %v491
        %541 = vmatpush.bf16.msra.mxu0 %v489
        %542 = vmatmul.bf16.gmra.mxu0 %v438
        %v543 = vpop.f32.mrf.mxu0
        %v544 = vadd.f32 0.0, %v543
        %v545 = vpop.f32.mrf.mxu0
        %v546 = vadd.f32 0.0, %v545
        %547 = vdwg.mxu0
        %v548 = vmax.f32 %v530, 0.0
        %v549 = vmax.f32 %v544, 0.0
        %v550 = vmax.f32 %v532, 0.0
        %v551 = vmax.f32 %v546, 0.0
        %v552 = vmul.f32 %v548, %v548
        %v553 = vmul.f32 %v549, %v549
        %v554 = vmul.f32 %v550, %v550
        %v555 = vmul.f32 %v551, %v551
        %v556 = vld [vmem:[#allocation3] sm:$0xff]
        %v557 = vld [vmem:[#allocation3 + $0x8] sm:$0xff]
        %v558 = vpack.c.bf16 %v554, %v552
        %v559 = vpack.c.bf16 %v555, %v553
        %v560 = vld [vmem:[%s389] sm:$0xf]
        %v561 = vld [vmem:[%s389 + $0x4] sm:$0xf]
        %v562 = vld [vmem:[%s389 + $0x8] sm:$0xf]
        %v563 = vld [vmem:[%s389 + $0xc] sm:$0xf]
        %v564 = vld [vmem:[%s389 + $0x10] sm:$0xf]
        %v565 = vld [vmem:[%s389 + $0x14] sm:$0xf]
        %v566 = vld [vmem:[%s389 + $0x18] sm:$0xf]
        %v567 = vld [vmem:[%s389 + $0x1c] sm:$0xf]
        %v568 = vld [vmem:[%s389 + $0x20] sm:$0xf]
        %v569 = vld [vmem:[%s389 + $0x24] sm:$0xf]
        %v570 = vld [vmem:[%s389 + $0x28] sm:$0xf]
        %v571 = vld [vmem:[%s389 + $0x2c] sm:$0xf]
        %v572 = vld [vmem:[%s389 + $0x30] sm:$0xf]
        %v573 = vld [vmem:[%s389 + $0x34] sm:$0xf]
        %v574 = vld [vmem:[%s389 + $0x38] sm:$0xf]
        %v575 = vld [vmem:[%s389 + $0x3c] sm:$0xf]
        %v576 = vld [vmem:[%s389 + $0x40] sm:$0xf]
        %v577 = vld [vmem:[%s389 + $0x44] sm:$0xf]
        %v578 = vld [vmem:[%s389 + $0x48] sm:$0xf]
        %v579 = vld [vmem:[%s389 + $0x4c] sm:$0xf]
        %v580 = vld [vmem:[%s389 + $0x50] sm:$0xf]
        %v581 = vld [vmem:[%s389 + $0x54] sm:$0xf]
        %v582 = vld [vmem:[%s389 + $0x58] sm:$0xf]
        %v583 = vld [vmem:[%s389 + $0x5c] sm:$0xf]
        %v584 = vld [vmem:[%s389 + $0x60] sm:$0xf]
        %v585 = vld [vmem:[%s389 + $0x64] sm:$0xf]
        %v586 = vld [vmem:[%s389 + $0x68] sm:$0xf]
        %v587 = vld [vmem:[%s389 + $0x6c] sm:$0xf]
        %v588 = vld [vmem:[%s389 + $0x70] sm:$0xf]
        %v589 = vld [vmem:[%s389 + $0x74] sm:$0xf]
        %v590 = vld [vmem:[%s389 + $0x78] sm:$0xf]
        %v591 = vld [vmem:[%s389 + $0x7c] sm:$0xf]
        %v624 = vunpack.c.l.b16 %v560
        %v625 = vunpack.c.l.b16 %v561
        %v626 = vunpack.c.l.b16 %v562
        %v627 = vunpack.c.l.b16 %v563
        %v628 = vunpack.c.l.b16 %v564
        %v629 = vunpack.c.l.b16 %v565
        %v630 = vunpack.c.l.b16 %v566
        %v631 = vunpack.c.l.b16 %v567
        %v632 = vunpack.c.l.b16 %v568
        %v633 = vunpack.c.l.b16 %v569
        %v634 = vunpack.c.l.b16 %v570
        %v635 = vunpack.c.l.b16 %v571
        %v636 = vunpack.c.l.b16 %v572
        %v637 = vunpack.c.l.b16 %v573
        %v638 = vunpack.c.l.b16 %v574
        %v639 = vunpack.c.l.b16 %v575
        %v640 = vunpack.c.l.b16 %v576
        %v641 = vunpack.c.l.b16 %v577
        %v642 = vunpack.c.l.b16 %v578
        %v643 = vunpack.c.l.b16 %v579
        %v644 = vunpack.c.l.b16 %v580
        %v645 = vunpack.c.l.b16 %v581
        %v646 = vunpack.c.l.b16 %v582
        %v647 = vunpack.c.l.b16 %v583
        %v648 = vunpack.c.l.b16 %v584
        %v649 = vunpack.c.l.b16 %v585
        %v650 = vunpack.c.l.b16 %v586
        %v651 = vunpack.c.l.b16 %v587
        %v652 = vunpack.c.l.b16 %v588
        %v653 = vunpack.c.l.b16 %v589
        %v654 = vunpack.c.l.b16 %v590
        %v655 = vunpack.c.l.b16 %v591
        %v656 = vpack.c.b16 %v625, %v624
        %v657 = vpack.c.b16 %v627, %v626
        %v658 = vpack.c.b16 %v629, %v628
        %v659 = vpack.c.b16 %v631, %v630
        %v660 = vpack.c.b16 %v633, %v632
        %v661 = vpack.c.b16 %v635, %v634
        %v662 = vpack.c.b16 %v637, %v636
        %v663 = vpack.c.b16 %v639, %v638
        %v664 = vpack.c.b16 %v641, %v640
        %v665 = vpack.c.b16 %v643, %v642
        %v666 = vpack.c.b16 %v645, %v644
        %v667 = vpack.c.b16 %v647, %v646
        %v668 = vpack.c.b16 %v649, %v648
        %v669 = vpack.c.b16 %v651, %v650
        %v670 = vpack.c.b16 %v653, %v652
        %v671 = vpack.c.b16 %v655, %v654
        %688 = vmatpush.bf16.msra.mxu0 %v663
        %689 = vmatpush.bf16.msra.mxu0 %v662
        %690 = vmatpush.bf16.msra.mxu0 %v661
        %691 = vmatpush.bf16.msra.mxu0 %v660
        %692 = vmatpush.bf16.msra.mxu0 %v659
        %693 = vmatpush.bf16.msra.mxu0 %v658
        %694 = vmatpush.bf16.msra.mxu0 %v657
        %695 = vmatpush.bf16.msra.mxu0 %v656
        %696 = vmatmul.bf16.gmra.mxu0 %v558
        %v697 = vpop.f32.mrf.mxu0
        %v698 = vadd.f32 0.0, %v697
        %v699 = vpop.f32.mrf.mxu0
        %v700 = vadd.f32 0.0, %v699
        %701 = vdwg.mxu0
        %702 = vmatpush.bf16.msra.mxu0 %v671
        %703 = vmatpush.bf16.msra.mxu0 %v670
        %704 = vmatpush.bf16.msra.mxu0 %v669
        %705 = vmatpush.bf16.msra.mxu0 %v668
        %706 = vmatpush.bf16.msra.mxu0 %v667
        %707 = vmatpush.bf16.msra.mxu0 %v666
        %708 = vmatpush.bf16.msra.mxu0 %v665
        %709 = vmatpush.bf16.msra.mxu0 %v664
        %710 = vmatmul.bf16.gmra.mxu0 %v559
        %v711 = vpop.f32.mrf.mxu0
        %v712 = vadd.f32 %v698, %v711
        %v713 = vpop.f32.mrf.mxu0
        %v714 = vadd.f32 %v700, %v713
        %715 = vdwg.mxu0
        %v716 = vadd.f32 %v556, %v712
        %v717 = vadd.f32 %v557, %v714
        %718 = vst [vmem:[#allocation3] sm:$0xff] %v716
        %719 = vst [vmem:[#allocation3 + $0x8] sm:$0xff] %v717
        %p720 = scmp.eq.s32.totalorder %s22, 1
        // Predicated region
        $region83: #{cmix_forward.1} parent=73 // pred_check
          %p721 = pneg %p720
        $region84: #{cmix_forward.1} parent=73 // pred_check_branch
          %723 = sbr.rel (%p721) target = $region86
        $region85: #{cmix_forward.1} parent=73 // pred_region
          %v724 = vld [vmem:[#allocation3] sm:$0xff]
          %v725 = vld [vmem:[#allocation3 + $0x8] sm:$0xff]
          %726 = vst [vmem:[#allocation5] sm:$0xff] %v724
          %727 = vst [vmem:[#allocation5 + $0x8] sm:$0xff] %v725
        $region86: #{cmix_forward.1} parent=73 // pred_fallthru
          _
        // Predicated region
        $region87: #{cmix_forward.1} parent=73 // pred_check
          %p728 = pneg %p172
        $region88: #{cmix_forward.1} parent=73 // pred_check_branch
          %730 = sbr.rel (%p728) target = $region90
        $region89: #{cmix_forward.1} parent=73 // pred_region
          %s731 = smul.u32 2, %s21
          %733 = vsyncadd [#allocation6], 0
          %s734 = smul.addr %s731, 8
          %s735 = scalar_lea.hbm %s5, %s734
          %s736 = sshll.u32 [#allocation5], 4
          %s737 = int_to_ptr.vmem [resolvable:$true] %s736
          %s738 = sshll.u32 %s735, 4
          %s739 = int_to_ptr.hbm [resolvable:$true] %s738
          %744 = dma.vmem_to_hbm [thread:$0]  %s737, 256, %s739, [#allocation6], 128, 128, 8
        $region90: #{cmix_forward.1} parent=73 // pred_fallthru
          _
        // Predicated region
        $region91: #{cmix_forward.1} parent=73 // pred_check
          %p745 = pneg %p172
        $region92: #{cmix_forward.1} parent=73 // pred_check_branch
          %747 = sbr.rel (%p745) target = $region94
        $region93: #{cmix_forward.1} parent=73 // pred_region
          %749 = dma.done [#allocation6], 256
        $region94: #{cmix_forward.1} parent=73 // pred_fallthru
          _
      $region74: #{cmix_forward.1} parent=5 // pred_fallthru
        _
      %p750 = scmp.le.s32.totalorder 2, %s12
      // Predicated region
      $region95: #{cmix_forward.1} parent=5 // pred_check
        %p751 = pneg %p750
      $region96: #{cmix_forward.1} parent=5 // pred_check_branch
        %753 = sbr.rel (%p751) target = $region98
      $region97: #{cmix_forward.1} parent=5 // pred_region
        %s754 = ssub.s32 %s12, 2
      $region98: #{cmix_forward.1} parent=5 // pred_fallthru
        _
    $region6: #{cmix_forward.1} parent=1 // loop_footer
      %s16 = sadd.s32 1, %s12
    $region7: #{cmix_forward.1} parent=1 // loop_footer_branch
      %11 = sbr.rel target = $region3
    $region8: #{cmix_forward.1} parent=1 // loop_exit
      _
    %755 = vsyncpa [#allocation6], 1
    %s756 = scalar_lea.sflag [#allocation6], 1
    %757 = vsyncpa %s756, 1

</llo_original>
